<compile_context>
chip_gen: v6e
topology: v6e:2x2x1
jax: 0.10.0
libtpu: 0.0.40
codegen_flags: <defaults>
</compile_context>

<pallas_src>
import jax
import jax.numpy as jnp
from jax.experimental import pallas as pl
from jax.experimental.pallas import tpu as pltpu


def _nearest_gather_kernel(x_ref, idx_ref, o_ref):
    """out[s, p] = x[s, idx[0, p]]   (flat nearest-neighbour lane gather).

    x_ref:   (S, HW_in)  float32  source rows, resident across the HW_out axis
    idx_ref: (1, T)      int32    flat source index for each output lane
    o_ref:   (S, T)      float32
    """
    x = x_ref[...]                                    # (S, HW_in)
    idx = idx_ref[...]                                # (1, T)
    s = x.shape[0]
    t = idx.shape[-1]
    idx_b = jnp.broadcast_to(idx, (s, t))             # cheap sublane broadcast
    # Indices are in-bounds by construction (nearest resize), so skip masking.
    o_ref[...] = jnp.take_along_axis(x, idx_b, axis=1, mode="promise_in_bounds")


def _pick_lane_tile(n, max_tile=512):
    """Largest lane tile <= max_tile that divides n and is a multiple of 128
    (falls back to the full extent, which always satisfies the block rule)."""
    if n <= max_tile:
        return n
    for t in range(max_tile - max_tile % 128, 127, -128):
        if n % t == 0:
            return t
    return n


def image_to_lidar_scale(rv, transformed_img_features, *, max_lane_tile=512):
    """JAX/Pallas equivalent of ImageToLidarScale.forward."""
    b, c, h_in, w_in = transformed_img_features.shape
    h_out, w_out = rv.shape[2], rv.shape[3]

    # .float() cast (glue, plain JAX, matches torch: cast happens before resize)
    x = transformed_img_features.astype(jnp.float32)

    # F.interpolate(mode='nearest'): src = floor(dst * in / out)
    hi = (jnp.arange(h_out, dtype=jnp.int32) * h_in) // h_out          # (H_out,)
    wi = (jnp.arange(w_out, dtype=jnp.int32) * w_in) // w_out          # (W_out,)
    flat_idx = (hi[:, None] * w_in + wi[None, :]).reshape(1, h_out * w_out)
    flat_idx = flat_idx.astype(jnp.int32)

    hw_in = h_in * w_in
    hw_out = h_out * w_out
    bc = b * c
    x2d = x.reshape(bc, hw_in)

    # Sublane-dense row tiles: pack B*C together so C < 8 does not waste sublanes.
    s_tile = 8 if bc % 8 == 0 else bc
    # Lane-dense output tiles (multiple of 128): unmasked stores + pipeline depth.
    t_tile = _pick_lane_tile(hw_out, max_lane_tile)

    grid = (bc // s_tile, hw_out // t_tile)

    # TODO(synk): for very large H_in*W_in that does not fit VMEM, keep the
    # source in HBM (BlockSpec(memory_space=pl.ANY)) and manually DMA only the
    # touched source rows (double-buffered make_async_copy) before the lane
    # gather over columns.
    out2d = pl.pallas_call(
        _nearest_gather_kernel,
        out_shape=jax.ShapeDtypeStruct((bc, hw_out), jnp.float32),
        grid=grid,
        in_specs=[
            # Source image rows: index_map is independent of the HW_out grid
            # axis -> block stays resident in VMEM across all output tiles.
            pl.BlockSpec((s_tile, hw_in), lambda i, t: (i, 0)),
            # Flat gather indices for this output tile.
            pl.BlockSpec((1, t_tile), lambda i, t: (0, t)),
        ],
        out_specs=pl.BlockSpec((s_tile, t_tile), lambda i, t: (i, t)),
        compiler_params=pltpu.CompilerParams(
            dimension_semantics=("parallel", "parallel")),
    )(x2d, flat_idx)

    return out2d.reshape(b, c, h_out, w_out)


def _reference(rv, transformed_img_features):
    """Pure-JAX reference (nearest resize, PyTorch index convention)."""
    b, c, h_in, w_in = transformed_img_features.shape
    h_out, w_out = rv.shape[2], rv.shape[3]
    x = transformed_img_features.astype(jnp.float32)
    hi = (jnp.arange(h_out) * h_in) // h_out
    wi = (jnp.arange(w_out) * w_in) // w_out
    return x[:, :, hi, :][:, :, :, wi]


if __name__ == "__main__":
    key = jax.random.PRNGKey(0)
    k1, k2 = jax.random.split(key)

    B, C = 2, 4                       # image feature batch / channels
    H_IN, W_IN = 8, 16                # image feature spatial size (HW_in = 128)
    C_RV, H_OUT, W_OUT = 5, 32, 32    # lidar range view (only its H, W are used)

    feats = jax.random.normal(k1, (B, C, H_IN, W_IN), dtype=jnp.float32)
    rv = jax.random.normal(k2, (B, C_RV, H_OUT, W_OUT), dtype=jnp.float32)

    out = image_to_lidar_scale(rv, feats)
    out = jax.block_until_ready(out)

    ref = _reference(rv, feats)
    assert out.shape == (B, C, H_OUT, W_OUT)
    assert out.dtype == jnp.float32
    assert jnp.allclose(out, ref, atol=0.0), "mismatch vs reference"

    print("KERNEL_OK")
</pallas_src>

<mosaic_0001>
module attributes {stable_mosaic.version = 11 : i64} {
  func.func @_nearest_gather_kernel(%arg0: i32, %arg1: i32, %arg2: memref<8x128xf32, #tpu.memory_space<vmem>>, %arg3: memref<1x512xi32, #tpu.memory_space<vmem>>, %arg4: memref<8x512xf32, #tpu.memory_space<vmem>>) attributes {dimension_semantics = [#tpu.dimension_semantics<parallel>, #tpu.dimension_semantics<parallel>], iteration_bounds = array<i64: 1, 2>, scalar_prefetch = 0 : i64, scratch_operands = 0 : i64, tpu.core_type = #tpu.core_type<tc>, window_params = [{transform_indices = @transform_0, window_bounds = array<i64: 8, 128>}, {transform_indices = @transform_1, window_bounds = array<i64: 1, 512>}, {transform_indices = @transform_2, window_bounds = array<i64: 8, 512>}]} {
    %c0 = arith.constant 0 : index
    %c0_0 = arith.constant 0 : index
    %0 = vector.load %arg2[%c0, %c0_0] : memref<8x128xf32, #tpu.memory_space<vmem>>, vector<8x128xf32>
    %c0_1 = arith.constant 0 : index
    %c0_2 = arith.constant 0 : index
    %1 = vector.load %arg3[%c0_1, %c0_2] : memref<1x512xi32, #tpu.memory_space<vmem>>, vector<1x512xi32>
    %2 = vector.shape_cast %1 : vector<1x512xi32> to vector<1x512xi32>
    %3 = vector.broadcast %2 : vector<1x512xi32> to vector<8x512xi32>
    %4 = vector.shape_cast %3 : vector<8x512xi32> to vector<8x512x1xi32>
    %5 = vector.shape_cast %4 : vector<8x512x1xi32> to vector<8x512xi32>
    %6 = tpu.dynamic_gather %0[%5] in [1] : vector<8x128xf32>, vector<8x512xi32> -> vector<8x512xf32>
    %c0_3 = arith.constant 0 : index
    %c0_4 = arith.constant 0 : index
    %7 = vector.load %arg4[%c0_3, %c0_4] : memref<8x512xf32, #tpu.memory_space<vmem>>, vector<8x512xf32>
    tpu.vector_store %arg4[%c0_3, %c0_4], %6 {strides = array<i32>} : memref<8x512xf32, #tpu.memory_space<vmem>>, vector<8x512xf32>,
    return
  }
  func.func @transform_0(%arg0: i32, %arg1: i32) -> (i32, i32) {
    %c0_i32 = arith.constant 0 : i32
    %c0_i32_0 = arith.constant 0 : i32
    return %arg0, %c0_i32 : i32, i32
  }
  func.func @transform_1(%arg0: i32, %arg1: i32) -> (i32, i32) {
    %c0_i32 = arith.constant 0 : i32
    %c0_i32_0 = arith.constant 0 : i32
    return %c0_i32, %arg1 : i32, i32
  }
  func.func @transform_2(%arg0: i32, %arg1: i32) -> (i32, i32) {
    %c0_i32 = arith.constant 0 : i32
    return %arg0, %arg1 : i32, i32
  }
}

</mosaic_0001>

<llo_original>
// kernel: tpu_custom_call.1
$region0: #{tpu_custom_call.1}
  #allocation0 [shape = 'u32[]', space=smem, size = 0x4, offset = 0x4, fixed_abs, tag = 'smem constant byte address 0x4 - core index']
  #allocation1 [shape = 'u32[144,128]{1,0:T(1,128)}', space=vmem, size = 0x12000, scoped, tag = 'internal scratch']
  %s0 = inlined_call_operand.hbm [shape: f32[8,128], index: 0, kind: input, shape index: {}]
  %s1 = inlined_call_operand.hbm [shape: s32[1,1024], index: 1, kind: input, shape index: {}]
  %s2 = inlined_call_operand.hbm [shape: f32[8,1024], index: 2, kind: output, shape index: {}]
  %s3 = sld [smem:[#allocation0]]
  $region49: #{tpu_custom_call.1} parent=0
    _
  %s5 = ssub.s32 1, %s3
  %s6 = scalar_select 0, %s5, %s3
  $region1: #{tpu_custom_call.1} parent=0
    #allocation2 [shape = 'u8[4096]{0}', space=vmem, size = 0x1000, scoped, tag = 'input window, operand 0, single buffered']
    #allocation3 [shape = 's32[2]{0}', space=sflag, size = 0x8, scoped, tag = 'scoped memory for tpu_custom_call.1']
    #allocation4 [shape = 's32[2]{0}', space=sflag, size = 0x8, scoped, tag = 'scoped memory for tpu_custom_call.1']
    #allocation5 [shape = 'u8[4096]{0}', space=vmem, size = 0x1000, scoped, tag = 'input window, operand 1']
    #allocation6 [shape = 's32[2]{0}', space=sflag, size = 0x8, scoped, tag = 'scoped memory for tpu_custom_call.1']
    #allocation7 [shape = 'u8[32768]{0}', space=vmem, size = 0x8000, scoped, tag = 'output window, operand 0']
    %7 = vsyncpa [#allocation3], 0
    %8 = vsyncpa [#allocation6], 0
    %s9 = scalar_lea.sflag [#allocation6], 1
    %10 = vsyncpa %s9, 0
    %11 = vsyncpa [#allocation4], 0
    %s12 = scalar_lea.sflag [#allocation4], 1
    %13 = vsyncpa %s12, 0
    loop: start=0, step=1, limit=4
    $region2: #{tpu_custom_call.1} parent=1 // loop_pre_header
      _
    $region3: #{tpu_custom_call.1} parent=1 // loop_header
      %s15 = sphi 0, %s19
      %p16 = scmp.ge.s32.totalorder %s15, 4
      %s22 = sphi 0, %s34
      %s23 = sphi 0, %s30
      %s24 = sphi 0, %s22
      %s25 = sphi 0, %s23
      %s26 = sphi 0, %s24
      %s27 = sphi 0, %s25
      %s37 = sphi 0, %s39
      %s40 = sphi 0, %s37
      %s41 = sphi 0, %s40
      %s57 = sphi 0, %s41
      %s63 = sphi 0, %s65
      %s66 = sphi 0, %s63
      %s67 = sphi 0, %s66
      %s83 = sphi 0, %s67
      %s91 = sphi 0, %s93
      %s94 = sphi 0, %s91
      %s95 = sphi 0, %s94
      %s111 = sphi 0, %s95
    $region4: #{tpu_custom_call.1} parent=1 // loop_header_branch
      %18 = sbr.rel (%p16) target = $region8
    $region5: #{tpu_custom_call.1} parent=1 // loop_body
      %s20 = ssub.s32 %s15, 1
      %s21 = ssub.s32 %s15, 2
      %s28 = sadd.s32 1, %s23
      %p29 = scmp.ge.s32.totalorder %s28, 2
      %s30 = scalar_select %p29, 0, %s28
      %s31 = sadd.s32 1, %s22
      %s32 = scalar_select %p29, %s31, %s22
      %p33 = scmp.ge.s32.totalorder %s32, 1
      %s34 = scalar_select %p33, 0, %s32
      %s35 = ssub.s32 %s22, %s34
      %p36 = scmp.eq.s32.totalorder %s35, 0
      %s38 = sadd.s32 %s37, 1
      %s39 = scalar_select %p36, %s37, %s38
      %p42 = pneg %p36
      %p43 = scmp.eq.s32.totalorder %s15, 1
      %p44 = por %p42, %p43
      %p45 = scmp.ne.s32.totalorder %s37, %s40
      %p46 = scmp.eq.s32.totalorder %s15, 0
      %p47 = por %p45, %p46
      %p48 = scmp.ne.s32.totalorder %s37, %s40
      %p49 = scmp.eq.s32.totalorder %s20, 1
      %p50 = por %p48, %p49
      %p51 = scmp.ne.s32.totalorder %s40, %s41
      %p52 = scmp.eq.s32.totalorder %s20, 0
      %p53 = por %p51, %p52
      %p54 = scmp.ne.s32.totalorder %s40, %s41
      %p55 = scmp.eq.s32.totalorder %s21, 1
      %p56 = por %p54, %p55
      %p58 = scmp.ne.s32.totalorder %s41, %s57
      %p59 = scmp.eq.s32.totalorder %s21, 0
      %p60 = por %p58, %p59
      %s61 = ssub.s32 %s23, %s30
      %p62 = scmp.eq.s32.totalorder %s61, 0
      %s64 = sadd.s32 %s63, 1
      %s65 = scalar_select %p62, %s63, %s64
      %p68 = pneg %p62
      %p69 = scmp.eq.s32.totalorder %s15, 1
      %p70 = por %p68, %p69
      %p71 = scmp.ne.s32.totalorder %s63, %s66
      %p72 = scmp.eq.s32.totalorder %s15, 0
      %p73 = por %p71, %p72
      %p74 = scmp.ne.s32.totalorder %s63, %s66
      %p75 = scmp.eq.s32.totalorder %s20, 1
      %p76 = por %p74, %p75
      %p77 = scmp.ne.s32.totalorder %s66, %s67
      %p78 = scmp.eq.s32.totalorder %s20, 0
      %p79 = por %p77, %p78
      %p80 = scmp.ne.s32.totalorder %s66, %s67
      %p81 = scmp.eq.s32.totalorder %s21, 1
      %p82 = por %p80, %p81
      %p84 = scmp.ne.s32.totalorder %s67, %s83
      %p85 = scmp.eq.s32.totalorder %s21, 0
      %p86 = por %p84, %p85
      %s87 = ssub.s32 %s22, %s34
      %s88 = ssub.s32 %s23, %s30
      %s89 = sor.u32 %s87, %s88
      %p90 = scmp.eq.s32.totalorder %s89, 0
      %s92 = sadd.s32 %s91, 1
      %s93 = scalar_select %p90, %s91, %s92
      %p96 = pneg %p90
      %p97 = scmp.eq.s32.totalorder %s15, 1
      %p98 = por %p96, %p97
      %p99 = scmp.ne.s32.totalorder %s91, %s94
      %p100 = scmp.eq.s32.totalorder %s15, 0
      %p101 = por %p99, %p100
      %p102 = scmp.ne.s32.totalorder %s91, %s94
      %p103 = scmp.eq.s32.totalorder %s20, 1
      %p104 = por %p102, %p103
      %p105 = scmp.ne.s32.totalorder %s94, %s95
      %p106 = scmp.eq.s32.totalorder %s20, 0
      %p107 = por %p105, %p106
      %p108 = scmp.ne.s32.totalorder %s94, %s95
      %p109 = scmp.eq.s32.totalorder %s21, 1
      %p110 = por %p108, %p109
      %p112 = scmp.ne.s32.totalorder %s95, %s111
      %p113 = scmp.eq.s32.totalorder %s21, 0
      %p114 = por %p112, %p113
      %p115 = scmp.le.s32.totalorder 1, %s15
      %p116 = scmp.lt.s32.totalorder %s15, 3
      %p117 = pnand %p115, %p116
      %p118 = pneg %p117
      // Predicated region
      $region9: #{tpu_custom_call.1} parent=5 // pred_check
        _
      $region10: #{tpu_custom_call.1} parent=5 // pred_check_branch
        %120 = sbr.rel (%p117) target = $region12
      $region11: #{tpu_custom_call.1} parent=5 // pred_region
        %s121 = ssub.s32 %s15, 1
        // Predicated region
        $region13: #{tpu_custom_call.1} parent=11 // pred_check
          %p122 = pneg %p53
        $region14: #{tpu_custom_call.1} parent=11 // pred_check_branch
          %124 = sbr.rel (%p122) target = $region16
        $region15: #{tpu_custom_call.1} parent=11 // pred_region
          %s126 = ssub.s32 128, 128
          %127 = vsyncadd [#allocation3], %s126
          %s128 = smul.addr %s24, 128
          %s129 = scalar_lea.hbm %s0, %s128
          %s131 = sshll.u32 [#allocation2], 4
          %s132 = int_to_ptr.vmem [resolvable:$true] %s131
          %134 = dma.hbm_to_vmem [thread:$0]  %s129, 128, %s132, [#allocation3]
        $region16: #{tpu_custom_call.1} parent=11 // pred_fallthru
          _
      $region12: #{tpu_custom_call.1} parent=5 // pred_fallthru
        _
      %p135 = scmp.lt.s32.totalorder %s15, 2
      // Predicated region
      $region17: #{tpu_custom_call.1} parent=5 // pred_check
        %p136 = pneg %p135
      $region18: #{tpu_custom_call.1} parent=5 // pred_check_branch
        %138 = sbr.rel (%p136) target = $region20
      $region19: #{tpu_custom_call.1} parent=5 // pred_region
        // Predicated region
        $region21: #{tpu_custom_call.1} parent=19 // pred_check
          %p139 = pneg %p73
        $region22: #{tpu_custom_call.1} parent=19 // pred_check_branch
          %141 = sbr.rel (%p139) target = $region24
        $region23: #{tpu_custom_call.1} parent=19 // pred_region
          %s142 = sand.u32 %s63, 1
          %s143 = scalar_lea.sflag [#allocation6], %s142
          %s144 = sand.u32 %s63, 1
          %s145 = smul.addr %s144, 4
          %s146 = scalar_lea.vmem [#allocation5], %s145
          %s147 = smul.u32 4, %s23
          %s149 = ssub.s32 64, 64
          %150 = vsyncadd %s143, %s149
          %s151 = smul.addr %s147, 16
          %s152 = scalar_lea.hbm %s1, %s151
          %s154 = sshll.u32 %s146, 4
          %s155 = int_to_ptr.vmem [resolvable:$true] %s154
          %157 = dma.hbm_to_vmem [thread:$0]  %s152, 64, %s155, %s143
        $region24: #{tpu_custom_call.1} parent=19 // pred_fallthru
          _
      $region20: #{tpu_custom_call.1} parent=5 // pred_fallthru
        _
      %p158 = scmp.le.s32.totalorder 1, %s15
      %p159 = scmp.lt.s32.totalorder %s15, 3
      %p160 = pnand %p158, %p159
      %p161 = pneg %p160
      // Predicated region
      $region25: #{tpu_custom_call.1} parent=5 // pred_check
        _
      $region26: #{tpu_custom_call.1} parent=5 // pred_check_branch
        %163 = sbr.rel (%p160) target = $region28
      $region27: #{tpu_custom_call.1} parent=5 // pred_region
        %s164 = ssub.s32 %s15, 1
        // Predicated region
        $region29: #{tpu_custom_call.1} parent=27 // pred_check
          %p165 = pneg %p53
        $region30: #{tpu_custom_call.1} parent=27 // pred_check_branch
          %167 = sbr.rel (%p165) target = $region32
        $region31: #{tpu_custom_call.1} parent=27 // pred_region
          %168 = dma.done [#allocation3], 128
        $region32: #{tpu_custom_call.1} parent=27 // pred_fallthru
          _
        %s169 = sand.u32 %s66, 1
        %s170 = scalar_lea.sflag [#allocation6], %s169
        %s171 = sand.u32 %s66, 1
        %s172 = smul.addr %s171, 4
        %s173 = scalar_lea.vmem [#allocation5], %s172
        // Predicated region
        $region33: #{tpu_custom_call.1} parent=27 // pred_check
          %p174 = pneg %p79
        $region34: #{tpu_custom_call.1} parent=27 // pred_check_branch
          %176 = sbr.rel (%p174) target = $region36
        $region35: #{tpu_custom_call.1} parent=27 // pred_region
          %177 = dma.done %s170, 64
        $region36: #{tpu_custom_call.1} parent=27 // pred_fallthru
          _
        %p178 = pneg %p53
        %p179 = pneg %p50
        %s180 = sand.u32 %s66, 1
        %s181 = scalar_lea.sflag [#allocation6], %s180
        %s182 = sand.u32 %s66, 1
        %s183 = smul.addr %s182, 4
        %s184 = scalar_lea.vmem [#allocation5], %s183
        %p185 = pneg %p79
        %p186 = pneg %p76
        %p187 = pneg %p107
        %p188 = pneg %p104
        %s189 = sand.u32 %s94, 1
        %s190 = scalar_lea.sflag [#allocation4], %s189
        %s191 = sand.u32 %s94, 1
        %s192 = smul.addr %s191, 32
        %s193 = scalar_lea.vmem [#allocation7], %s192
        %s194 = smul.u32 4, %s25
        %s195 = smul.u32 4, %s25
        %v196 = vld [vmem:[#allocation2] sm:$0xff]
        %v197 = vld [vmem:[%s173] sm:$0xf]
        %v198 = vlaneseq
        %v199 = vshrl.u32 %v198, 7
        %v200 = vsub.s32 0, %v199
        %v201 = vrot.slane %v197, %v200
        %v202 = vlaneseq
        %v203 = vshrl.u32 %v202, 7
        %v204 = vsub.s32 1, %v203
        %v205 = vrot.slane %v197, %v204
        %v206 = vlaneseq
        %v207 = vshrl.u32 %v206, 7
        %v208 = vsub.s32 2, %v207
        %v209 = vrot.slane %v197, %v208
        %v210 = vlaneseq
        %v211 = vshrl.u32 %v210, 7
        %v212 = vsub.s32 3, %v211
        %v213 = vrot.slane %v197, %v212
        %214 = vset.pattern.permute.xlu0 %v201
        %215 = vperm.xlu0 %214, %v196
        %v216 = vpop.permute.xlu0 %215
        %217 = vset.pattern.permute.xlu0 %v205
        %218 = vperm.xlu0 %217, %v196
        %v219 = vpop.permute.xlu0 %218
        %220 = vset.pattern.permute.xlu0 %v209
        %221 = vperm.xlu0 %220, %v196
        %v222 = vpop.permute.xlu0 %221
        %223 = vset.pattern.permute.xlu0 %v213
        %224 = vperm.xlu0 %223, %v196
        %v225 = vpop.permute.xlu0 %224
        %226 = vst [vmem:[%s193] sm:$0xff] %v216
        %227 = vst [vmem:[%s193 + $0x8] sm:$0xff] %v219
        %228 = vst [vmem:[%s193 + $0x10] sm:$0xff] %v222
        %229 = vst [vmem:[%s193 + $0x18] sm:$0xff] %v225
        %s230 = sand.u32 %s94, 1
        %s231 = scalar_lea.sflag [#allocation4], %s230
        %s232 = sand.u32 %s94, 1
        %s233 = smul.addr %s232, 32
        %s234 = scalar_lea.vmem [#allocation7], %s233
        // Predicated region
        $region37: #{tpu_custom_call.1} parent=27 // pred_check
          %p235 = pneg %p104
        $region38: #{tpu_custom_call.1} parent=27 // pred_check_branch
          %237 = sbr.rel (%p235) target = $region40
        $region39: #{tpu_custom_call.1} parent=27 // pred_region
          %s238 = smul.u32 4, %s25
          %s240 = ssub.s32 512, 512
          %241 = vsyncadd %s231, %s240
          %s242 = smul.addr %s24, 8
          %s243 = sadd.s32 %s238, %s242
          %s244 = smul.addr %s243, 128
          %s245 = scalar_lea.hbm %s2, %s244
          %s247 = sshll.u32 %s234, 4
          %s248 = int_to_ptr.vmem [resolvable:$true] %s247
          %250 = dma.vmem_to_hbm [thread:$0]  %s248, 512, %s245, %s231
        $region40: #{tpu_custom_call.1} parent=27 // pred_fallthru
          _
      $region28: #{tpu_custom_call.1} parent=5 // pred_fallthru
        _
      %p251 = scmp.le.s32.totalorder 2, %s15
      // Predicated region
      $region41: #{tpu_custom_call.1} parent=5 // pred_check
        %p252 = pneg %p251
      $region42: #{tpu_custom_call.1} parent=5 // pred_check_branch
        %254 = sbr.rel (%p252) target = $region44
      $region43: #{tpu_custom_call.1} parent=5 // pred_region
        %s255 = ssub.s32 %s15, 2
        // Predicated region
        $region45: #{tpu_custom_call.1} parent=43 // pred_check
          %p256 = pneg %p110
        $region46: #{tpu_custom_call.1} parent=43 // pred_check_branch
          %258 = sbr.rel (%p256) target = $region48
        $region47: #{tpu_custom_call.1} parent=43 // pred_region
          %s259 = sand.u32 %s95, 1
          %s260 = scalar_lea.sflag [#allocation4], %s259
          %s261 = sand.u32 %s95, 1
          %s262 = smul.addr %s261, 32
          %s263 = scalar_lea.vmem [#allocation7], %s262
          %264 = dma.done %s260, 512
        $region48: #{tpu_custom_call.1} parent=43 // pred_fallthru
          _
      $region44: #{tpu_custom_call.1} parent=5 // pred_fallthru
        _
    $region6: #{tpu_custom_call.1} parent=1 // loop_footer
      %s19 = sadd.s32 1, %s15
    $region7: #{tpu_custom_call.1} parent=1 // loop_footer_branch
      %14 = sbr.rel target = $region3
    $region8: #{tpu_custom_call.1} parent=1 // loop_exit
      _
    %265 = vsyncpa [#allocation3], 1
    %s266 = scalar_lea.sflag [#allocation3], 1
    %267 = vsyncpa %s266, 1
    %268 = vsyncpa [#allocation6], 1
    %s269 = scalar_lea.sflag [#allocation6], 1
    %270 = vsyncpa %s269, 1
    %271 = vsyncpa [#allocation4], 1
    %s272 = scalar_lea.sflag [#allocation4], 1
    %273 = vsyncpa %s272, 1

</llo_original>
